<compile_context>
chip_gen: v7x
topology: tpu7x:2x2x1
jax: 0.10.0
libtpu: 0.0.40
codegen_flags: <defaults>
</compile_context>

<pallas_src>
import jax
import jax.numpy as jnp
from jax.experimental import pallas as pl
from jax.experimental.pallas import tpu as pltpu


_DEFAULT_VMEM_BYTES = 64 * 1024 * 1024  # conservative: v7x per-TensorCore VMEM


def _vmem_capacity_bytes() -> int:
    """Physical VMEM per TensorCore; falls back to a conservative default."""
    try:
        info = pltpu.get_tpu_info()
        cap = int(getattr(info, "vmem_capacity_bytes", 0))
        if cap > 0:
            return cap
    except Exception:
        pass
    return _DEFAULT_VMEM_BYTES


def _round_down(x: int, m: int) -> int:
    return (x // m) * m


def _round_up(x: int, m: int) -> int:
    return ((x + m - 1) // m) * m


def _row_align(itemsize: int) -> int:
    # Sublane packing: f32 -> 8 rows/vreg, bf16/f16 -> 16, int8/fp8 -> 32.
    if itemsize >= 4:
        return 8
    if itemsize == 2:
        return 16
    return 32


def _pick_row_tile(rows: int, V: int, itemsize: int, vmem_cap: int) -> int:
    align = _row_align(itemsize)
    # VMEM bytes consumed per tile row:
    #   input + output, each double-buffered by the pipeline : 4 * V * itemsize
    #   in-kernel f32 temporaries (x, x-m, exp, out-cast), generous: 6 * V * 4
    bytes_per_row = 4 * V * itemsize + 6 * V * 4
    budget = int(vmem_cap * 0.6)          # leave headroom under vmem_limit
    tm = budget // max(bytes_per_row, 1)
    tm = min(tm, 1024)                    # >=512 rows already hits ~85% roofline
    tm = min(tm, _round_up(rows, align))  # don't tile past the (padded) array
    tm = max(_round_down(tm, align), align)
    return tm


def _log_softmax_kernel(x_ref, o_ref):
    # x_ref / o_ref: (tm, V) tile in VMEM.  log_softmax over the last dim,
    # computed in f32 regardless of the storage dtype.
    x = x_ref[...].astype(jnp.float32)
    m = jnp.max(x, axis=-1, keepdims=True)          # lane reduction (XLU)
    s = x - m                                        # VPU
    lse = jnp.log(jnp.sum(jnp.exp(s), axis=-1, keepdims=True))  # EUP + XLU
    o_ref[...] = (s - lse).astype(o_ref.dtype)


def abs_joint_net_forward(joinout: jax.Array, *, tm: int | None = None) -> jax.Array:
    """forward() of AbsJointNet: log_softmax(dim=-1) of the joint output.

    joinout: (..., V) float array (RNNT joiner output is (N, T, U, V)).
    Returns the same shape/dtype.
    """
    orig_shape = joinout.shape
    V = int(orig_shape[-1])
    rows = 1
    for d in orig_shape[:-1]:
        rows *= int(d)
    x2d = joinout.reshape(rows, V)

    itemsize = jnp.dtype(joinout.dtype).itemsize
    vmem_cap = _vmem_capacity_bytes()
    align = _row_align(itemsize)
    if tm is None:
        tm = _pick_row_tile(rows, V, itemsize, vmem_cap)
    else:
        tm = max(_round_down(int(tm), align), align)

    grid = (pl.cdiv(rows, tm),)  # last tile may be partial; Pallas masks it.
    vmem_limit = int(vmem_cap * 0.85)

    # TODO(synk): for extremely large padded vocabularies where even tm=align
    # rows exceed VMEM, a second "arbitrary" grid axis over V with an online
    # logsumexp scratch (two-pass) would be needed; typical ASR vocabs fit a
    # single (tm, V) block comfortably.
    out2d = pl.pallas_call(
        _log_softmax_kernel,
        out_shape=jax.ShapeDtypeStruct((rows, V), joinout.dtype),
        grid_spec=pltpu.PrefetchScalarGridSpec(
            num_scalar_prefetch=0,
            grid=grid,
            in_specs=[pl.BlockSpec((tm, V), lambda i: (i, 0))],
            out_specs=pl.BlockSpec((tm, V), lambda i: (i, 0)),
        ),
        compiler_params=pltpu.CompilerParams(
            dimension_semantics=("parallel",),
            vmem_limit_bytes=vmem_limit,
        ),
    )(x2d)

    return out2d.reshape(orig_shape)


if __name__ == "__main__":
    key = jax.random.PRNGKey(0)
    k0, k1 = jax.random.split(key)

    # Test 1: small RNNT-joiner-like shape, f32, lane-aligned vocab,
    # auto-selected (VMEM-budgeted) row tile.
    N, T, U, V = 2, 8, 4, 128
    joinout = jax.random.normal(k0, (N, T, U, V), dtype=jnp.float32)
    out = jax.block_until_ready(abs_joint_net_forward(joinout))
    ref = jax.nn.log_softmax(joinout, axis=-1)
    assert out.shape == joinout.shape and out.dtype == joinout.dtype
    assert jnp.allclose(out, ref, atol=1e-5, rtol=1e-5)

    # Test 2: bf16, non-divisible row count (2*7*5 = 70 rows) with a forced
    # small tile so the masked partial last block path is exercised.
    N2, T2, U2, V2 = 2, 7, 5, 384
    joinout_bf16 = jax.random.normal(k1, (N2, T2, U2, V2), dtype=jnp.float32)
    joinout_bf16 = joinout_bf16.astype(jnp.bfloat16)
    out2 = jax.block_until_ready(abs_joint_net_forward(joinout_bf16, tm=16))
    ref2 = jax.nn.log_softmax(
        joinout_bf16.astype(jnp.float32), axis=-1
    ).astype(jnp.bfloat16)
    assert out2.shape == joinout_bf16.shape and out2.dtype == jnp.bfloat16
    assert jnp.allclose(
        out2.astype(jnp.float32), ref2.astype(jnp.float32), atol=2e-2, rtol=2e-2
    )

    print("KERNEL_OK")
</pallas_src>

<mosaic_0001>
module attributes {stable_mosaic.version = 11 : i64} {
  func.func @_log_softmax_kernel(%arg0: i32, %arg1: memref<64x128xf32, #tpu.memory_space<vmem>>, %arg2: memref<64x128xf32, #tpu.memory_space<vmem>>) attributes {dimension_semantics = [#tpu.dimension_semantics<parallel>], iteration_bounds = array<i64: 1>, scalar_prefetch = 0 : i64, scratch_operands = 0 : i64, tpu.core_type = #tpu.core_type<tc>, window_params = [{transform_indices = @transform_0, window_bounds = array<i64: 64, 128>}, {transform_indices = @transform_1, window_bounds = array<i64: 64, 128>}]} {
    %c0 = arith.constant 0 : index
    %c0_0 = arith.constant 0 : index
    %0 = vector.load %arg1[%c0, %c0_0] : memref<64x128xf32, #tpu.memory_space<vmem>>, vector<64x128xf32>
    %cst = arith.constant dense<0xFF800000> : vector<64xf32>
    %1 = vector.multi_reduction <maximumf>, %0, %cst [1] : vector<64x128xf32> to vector<64xf32>
    %2 = vector.shape_cast %1 : vector<64xf32> to vector<64x1xf32>
    %3 = vector.broadcast %2 : vector<64x1xf32> to vector<64x128xf32>
    %4 = arith.subf %0, %3 : vector<64x128xf32>
    %5 = math.exp %4 : vector<64x128xf32>
    %cst_1 = arith.constant dense<0.000000e+00> : vector<64xf32>
    %6 = vector.multi_reduction <add>, %5, %cst_1 [1] : vector<64x128xf32> to vector<64xf32>
    %7 = vector.shape_cast %6 : vector<64xf32> to vector<64x1xf32>
    %8 = math.log %7 : vector<64x1xf32>
    %9 = vector.broadcast %8 : vector<64x1xf32> to vector<64x128xf32>
    %10 = arith.subf %4, %9 : vector<64x128xf32>
    %c0_2 = arith.constant 0 : index
    %c0_3 = arith.constant 0 : index
    %11 = vector.load %arg2[%c0_2, %c0_3] : memref<64x128xf32, #tpu.memory_space<vmem>>, vector<64x128xf32>
    tpu.vector_store %arg2[%c0_2, %c0_3], %10 {strides = array<i32>} : memref<64x128xf32, #tpu.memory_space<vmem>>, vector<64x128xf32>,
    return
  }
  func.func @transform_0(%arg0: i32) -> (i32, i32) {
    %c0_i32 = arith.constant 0 : i32
    %c0_i32_0 = arith.constant 0 : i32
    return %arg0, %c0_i32 : i32, i32
  }
  func.func @transform_1(%arg0: i32) -> (i32, i32) {
    %c0_i32 = arith.constant 0 : i32
    %c0_i32_0 = arith.constant 0 : i32
    return %arg0, %c0_i32 : i32, i32
  }
}

</mosaic_0001>

<llo_original>
// kernel: tpu_custom_call.1
$region0: #{tpu_custom_call.1}
  #allocation0 [shape = 'u32[]', space=smem, size = 0x4, offset = 0x4, fixed_abs, tag = 'smem constant byte address 0x4 - core index']
  #allocation1 [shape = 'u32[144,128]{1,0:T(1,128)}', space=vmem, size = 0x12000, scoped, tag = 'internal scratch']
  %s0 = inlined_call_operand.hbm [shape: f32[64,128], index: 0, kind: input, shape index: {}]
  %s1 = inlined_call_operand.hbm [shape: f32[64,128], index: 1, kind: output, shape index: {}]
  %s2 = sld [smem:[#allocation0]]
  $region18: #{tpu_custom_call.1} parent=0
    _
  %s4 = ssub.s32 1, %s2
  %s5 = scalar_select 0, %s4, %s2
  $region1: #{tpu_custom_call.1} parent=0
    #allocation2 [shape = 'u8[32768]{0}', space=vmem, size = 0x8000, scoped, tag = 'input window, operand 0, single buffered']
    #allocation3 [shape = 's32[1]{0}', space=sflag, size = 0x4, scoped, tag = 'scoped memory for tpu_custom_call.1']
    #allocation4 [shape = 's32[1]{0}', space=sflag, size = 0x4, scoped, tag = 'scoped memory for tpu_custom_call.1']
    #allocation5 [shape = 'u8[32768]{0}', space=vmem, size = 0x8000, scoped, tag = 'output window, operand 0, single buffered']
    %6 = vsyncpa [#allocation3], 0
    %7 = vsyncpa [#allocation4], 0
    // Predicated region
    $region2: #{tpu_custom_call.1} parent=1 // pred_check
      _
    $region3: #{tpu_custom_call.1} parent=1 // pred_check_branch
      %9 = sbr.rel (0) target = $region5
    $region4: #{tpu_custom_call.1} parent=1 // pred_region
      %s11 = ssub.s32 1024, 1024
      %12 = vsyncadd [#allocation3], %s11
      %s13 = sshll.u32 [#allocation2], 4
      %s14 = int_to_ptr.vmem [resolvable:$true] %s13
      %19 = dma.hbm_to_vmem [thread:$0]  %s0, 1024, %s14, [#allocation3], 128, 128, 8
    $region5: #{tpu_custom_call.1} parent=1 // pred_fallthru
      _
    // Predicated region
    $region6: #{tpu_custom_call.1} parent=1 // pred_check
      _
    $region7: #{tpu_custom_call.1} parent=1 // pred_check_branch
      %21 = sbr.rel (0) target = $region9
    $region8: #{tpu_custom_call.1} parent=1 // pred_region
      %22 = dma.done [#allocation3], 1024
    $region9: #{tpu_custom_call.1} parent=1 // pred_fallthru
      _
    %v23 = vld [vmem:[#allocation2] sm:$0xff]
    %v24 = vld [vmem:[#allocation2 + $0x8] sm:$0xff]
    %v25 = vld [vmem:[#allocation2 + $0x10] sm:$0xff]
    %v26 = vld [vmem:[#allocation2 + $0x18] sm:$0xff]
    %v27 = vld [vmem:[#allocation2 + $0x20] sm:$0xff]
    %v28 = vld [vmem:[#allocation2 + $0x28] sm:$0xff]
    %v29 = vld [vmem:[#allocation2 + $0x30] sm:$0xff]
    %v30 = vld [vmem:[#allocation2 + $0x38] sm:$0xff]
    %31 = vmax.xlane.f32.xlu0 %v23
    %v32 = vpop.xlane.xlu0 %31
    %33 = vmax.xlane.f32.xlu0 %v24
    %v34 = vpop.xlane.xlu0 %33
    %35 = vmax.xlane.f32.xlu0 %v25
    %v36 = vpop.xlane.xlu0 %35
    %37 = vmax.xlane.f32.xlu0 %v26
    %v38 = vpop.xlane.xlu0 %37
    %39 = vmax.xlane.f32.xlu0 %v27
    %v40 = vpop.xlane.xlu0 %39
    %41 = vmax.xlane.f32.xlu0 %v28
    %v42 = vpop.xlane.xlu0 %41
    %43 = vmax.xlane.f32.xlu0 %v29
    %v44 = vpop.xlane.xlu0 %43
    %45 = vmax.xlane.f32.xlu0 %v30
    %v46 = vpop.xlane.xlu0 %45
    %v47 = vsub.f32 %v23, %v32
    %v48 = vsub.f32 %v24, %v34
    %v49 = vsub.f32 %v25, %v36
    %v50 = vsub.f32 %v26, %v38
    %v51 = vsub.f32 %v27, %v40
    %v52 = vsub.f32 %v28, %v42
    %v53 = vsub.f32 %v29, %v44
    %v54 = vsub.f32 %v30, %v46
    %v55 = vmul.f32 %v47, 1.442695
    %v56 = vpow.pop %v55
    %v57 = vmul.f32 %v48, 1.442695
    %v58 = vpow.pop %v57
    %v59 = vmul.f32 %v49, 1.442695
    %v60 = vpow.pop %v59
    %v61 = vmul.f32 %v50, 1.442695
    %v62 = vpow.pop %v61
    %v63 = vmul.f32 %v51, 1.442695
    %v64 = vpow.pop %v63
    %v65 = vmul.f32 %v52, 1.442695
    %v66 = vpow.pop %v65
    %v67 = vmul.f32 %v53, 1.442695
    %v68 = vpow.pop %v67
    %v69 = vmul.f32 %v54, 1.442695
    %v70 = vpow.pop %v69
    %71 = vadd.xlane.f32.xlu0 %v56
    %v72 = vpop.xlane.xlu0 %71
    %73 = vadd.xlane.f32.xlu0 %v58
    %v74 = vpop.xlane.xlu0 %73
    %75 = vadd.xlane.f32.xlu0 %v60
    %v76 = vpop.xlane.xlu0 %75
    %77 = vadd.xlane.f32.xlu0 %v62
    %v78 = vpop.xlane.xlu0 %77
    %79 = vadd.xlane.f32.xlu0 %v64
    %v80 = vpop.xlane.xlu0 %79
    %81 = vadd.xlane.f32.xlu0 %v66
    %v82 = vpop.xlane.xlu0 %81
    %83 = vadd.xlane.f32.xlu0 %v68
    %v84 = vpop.xlane.xlu0 %83
    %85 = vadd.xlane.f32.xlu0 %v70
    %v86 = vpop.xlane.xlu0 %85
    %v87 = vlog2.pop %v72
    %v88 = vmul.f32 %v87, 0.6931472
    %v89 = vlog2.pop %v74
    %v90 = vmul.f32 %v89, 0.6931472
    %v91 = vlog2.pop %v76
    %v92 = vmul.f32 %v91, 0.6931472
    %v93 = vlog2.pop %v78
    %v94 = vmul.f32 %v93, 0.6931472
    %v95 = vlog2.pop %v80
    %v96 = vmul.f32 %v95, 0.6931472
    %v97 = vlog2.pop %v82
    %v98 = vmul.f32 %v97, 0.6931472
    %v99 = vlog2.pop %v84
    %v100 = vmul.f32 %v99, 0.6931472
    %v101 = vlog2.pop %v86
    %v102 = vmul.f32 %v101, 0.6931472
    %v103 = vsub.f32 %v47, %v88
    %v104 = vsub.f32 %v48, %v90
    %v105 = vsub.f32 %v49, %v92
    %v106 = vsub.f32 %v50, %v94
    %v107 = vsub.f32 %v51, %v96
    %v108 = vsub.f32 %v52, %v98
    %v109 = vsub.f32 %v53, %v100
    %v110 = vsub.f32 %v54, %v102
    %111 = vst [vmem:[#allocation5] sm:$0xff] %v103
    %112 = vst [vmem:[#allocation5 + $0x8] sm:$0xff] %v104
    %113 = vst [vmem:[#allocation5 + $0x10] sm:$0xff] %v105
    %114 = vst [vmem:[#allocation5 + $0x18] sm:$0xff] %v106
    %115 = vst [vmem:[#allocation5 + $0x20] sm:$0xff] %v107
    %116 = vst [vmem:[#allocation5 + $0x28] sm:$0xff] %v108
    %117 = vst [vmem:[#allocation5 + $0x30] sm:$0xff] %v109
    %118 = vst [vmem:[#allocation5 + $0x38] sm:$0xff] %v110
    // Predicated region
    $region10: #{tpu_custom_call.1} parent=1 // pred_check
      _
    $region11: #{tpu_custom_call.1} parent=1 // pred_check_branch
      %120 = sbr.rel (0) target = $region13
    $region12: #{tpu_custom_call.1} parent=1 // pred_region
      %s122 = ssub.s32 1024, 1024
      %123 = vsyncadd [#allocation4], %s122
      %s124 = sshll.u32 [#allocation5], 4
      %s125 = int_to_ptr.vmem [resolvable:$true] %s124
      %130 = dma.vmem_to_hbm [thread:$0]  %s125, 1024, %s1, [#allocation4], 128, 128, 8
    $region13: #{tpu_custom_call.1} parent=1 // pred_fallthru
      _
    // Predicated region
    $region14: #{tpu_custom_call.1} parent=1 // pred_check
      _
    $region15: #{tpu_custom_call.1} parent=1 // pred_check_branch
      %132 = sbr.rel (0) target = $region17
    $region16: #{tpu_custom_call.1} parent=1 // pred_region
      %133 = dma.done [#allocation4], 1024
    $region17: #{tpu_custom_call.1} parent=1 // pred_fallthru
      _
    %134 = vsyncpa [#allocation3], 1
    %135 = vsyncpa [#allocation4], 1

</llo_original>
